<compile_context>
chip_gen: v5e
topology: v5e:2x2
jax: 0.10.0
libtpu: 0.0.40
codegen_flags: <defaults>
</compile_context>

<pallas_src>
import functools
import math

import jax
import jax.numpy as jnp
from jax.experimental import pallas as pl
from jax.experimental.pallas import tpu as pltpu


def _mu_sigma_kernel(x_ref, w_ref, b_ref, out_ref, *, c_dim, two_c):
    # x_ref:   [bm, pack*group_dim]
    # w_ref:   [pack*group_dim, pack*two_c]   (block-diagonal copies of W)
    # b_ref:   [1, pack*two_c]                (bias tiled `pack` times)
    # out_ref: [bm, pack*two_c]; within each two_c-lane group, the first c_dim
    #          lanes are mu and the last c_dim lanes are sigma.
    t = jnp.tanh(
        jnp.dot(x_ref[...], w_ref[...], preferred_element_type=jnp.float32)
        + b_ref[...]
    )
    # Per-lane select: sigma lanes get exp(t), mu lanes keep t.  exp runs on the
    # EUP (its own bundle slot) and the single wide store stays lane-dense.
    lane = jax.lax.broadcasted_iota(jnp.int32, t.shape, dimension=1)
    is_sigma = (lane % two_c) >= c_dim
    out_ref[...] = jnp.where(is_sigma, jnp.exp(t), t).astype(out_ref.dtype)


def _round_up(x, m):
    return ((x + m - 1) // m) * m


def mu_sigma_qc_forward(
    group_input,
    weight,
    bias,
    c_dim,
    *,
    block_batch=8192,
    min_pallas_batch=256,
    gridless_vmem_budget_bytes=12 * 1024 * 1024,
):
    """Pallas equivalent of mu_sigma_qc.forward.

    Args:
      group_input: [batch, group_dim] float32
      weight:      [group_dim, 2*c_dim] float32 (transposed nn.Linear weight)
      bias:        [2*c_dim] float32
    Returns:
      (mu, sigma): each [batch, c_dim] float32
    """
    batch, group_dim = group_input.shape
    two_c = weight.shape[1]
    assert two_c == 2 * c_dim

    # Tiny batches: custom-call launch overhead dominates; let XLA fuse plain jnp.
    if batch < min_pallas_batch:
        out = jnp.tanh(group_input @ weight + bias)
        return out[:, :c_dim], jnp.exp(out[:, c_dim:])

    # Lane-packing factor: pack rows until either the contraction or the output
    # fills (up to) 128 lanes.
    pack = max(1, min(128 // group_dim, 128 // two_c))

    batch_pad = _round_up(batch, pack)
    x = group_input
    if batch_pad != batch:
        x = jnp.pad(x, ((0, batch_pad - batch), (0, 0)))
    rows = batch_pad // pack
    packed_k = pack * group_dim
    packed_n = pack * two_c

    x_packed = x.reshape(rows, packed_k)
    if pack > 1:
        # Block-diagonal W: element (p*gd+g, q*tc+t) = eye[p,q] * W[g,t].
        eye = jnp.eye(pack, dtype=weight.dtype)
        w_packed = (eye[:, None, :, None] * weight[None, :, None, :]).reshape(
            packed_k, packed_n
        )
        b_packed = jnp.tile(bias, pack).reshape(1, packed_n)
    else:
        w_packed = weight
        b_packed = bias.reshape(1, packed_n)

    kernel = functools.partial(_mu_sigma_kernel, c_dim=c_dim, two_c=two_c)
    out_shape = jax.ShapeDtypeStruct((rows, packed_n), jnp.float32)
    cost = pl.CostEstimate(
        flops=2 * rows * packed_k * packed_n,
        transcendentals=2 * rows * packed_n,  # tanh + exp per output element
        bytes_accessed=4
        * (rows * packed_k + packed_k * packed_n + packed_n + rows * packed_n),
    )
    vmem_limit = 32 * 1024 * 1024  # safe on v5e/v6e/v7x
    total_bytes = 4 * (
        rows * packed_k + rows * packed_n + packed_k * packed_n + packed_n
    )

    if total_bytes <= gridless_vmem_budget_bytes:
        # Small/medium problem: gridless call, whole arrays as single VMEM blocks.
        # No pipeline prologue/epilogue, no per-operand double buffers.
        fused = pl.pallas_call(
            kernel,
            out_shape=out_shape,
            in_specs=[
                pl.BlockSpec(memory_space=pltpu.MemorySpace.VMEM),
                pl.BlockSpec(memory_space=pltpu.MemorySpace.VMEM),
                pl.BlockSpec(memory_space=pltpu.MemorySpace.VMEM),
            ],
            out_specs=pl.BlockSpec(memory_space=pltpu.MemorySpace.VMEM),
            compiler_params=pltpu.CompilerParams(vmem_limit_bytes=vmem_limit),
            cost_estimate=cost,
        )(x_packed, w_packed, b_packed)
    else:
        # Large problem: tile packed rows (ragged last block handled by Pallas
        # masking), keep W/bias resident, parallel batch axis for v7x megacore.
        block_rows = min(
            _round_up(max(block_batch // pack, 8), 8), _round_up(rows, 8)
        )
        n_tiles = pl.cdiv(rows, block_rows)
        if n_tiles < 2:
            # v7x has two TensorCores: give the parallel axis at least 2 tiles.
            block_rows = max(8, _round_up(pl.cdiv(rows, 2), 8))
            n_tiles = pl.cdiv(rows, block_rows)
        elif n_tiles % 2 == 1:
            # Prefer an even tile count so both TCs stay balanced.
            cand = max(8, _round_up(pl.cdiv(rows, n_tiles + 1), 8))
            if pl.cdiv(rows, cand) % 2 == 0:
                block_rows = cand
                n_tiles = pl.cdiv(rows, block_rows)

        fused = pl.pallas_call(
            kernel,
            out_shape=out_shape,
            grid=(n_tiles,),
            in_specs=[
                pl.BlockSpec((block_rows, packed_k), lambda i: (i, 0)),
                pl.BlockSpec((packed_k, packed_n), lambda i: (0, 0)),
                pl.BlockSpec((1, packed_n), lambda i: (0, 0)),
            ],
            out_specs=pl.BlockSpec((block_rows, packed_n), lambda i: (i, 0)),
            compiler_params=pltpu.CompilerParams(
                dimension_semantics=("parallel",),
                vmem_limit_bytes=vmem_limit,
            ),
            cost_estimate=cost,
        )(x_packed, w_packed, b_packed)

    # Un-pack rows, drop padding, split mu/sigma (free wrapper slices).
    fused = fused.reshape(batch_pad, two_c)[:batch]
    mu = fused[:, :c_dim]
    sigma = fused[:, c_dim:]
    return mu, sigma


def init_params(key, group_dim, c_dim):
    """Deterministic init matching nn.Linear's default (uniform +/- 1/sqrt(fan_in))."""
    kw, kb = jax.random.split(key)
    bound = 1.0 / math.sqrt(group_dim)
    # Stored as [group_dim, 2*c_dim] (transpose of PyTorch's [2*c_dim, group_dim]).
    weight = jax.random.uniform(
        kw, (group_dim, 2 * c_dim), minval=-bound, maxval=bound, dtype=jnp.float32
    )
    bias = jax.random.uniform(
        kb, (2 * c_dim,), minval=-bound, maxval=bound, dtype=jnp.float32
    )
    return weight, bias


def _reference(group_input, weight, bias, c_dim):
    out = jnp.tanh(group_input @ weight + bias)
    return out[:, :c_dim], jnp.exp(out[:, c_dim:])


if __name__ == "__main__":
    key = jax.random.PRNGKey(0)
    k_small, k_mid, k_big, k_param = jax.random.split(key, 4)

    group_dim = 32
    c_dim = 16
    weight, bias = init_params(k_param, group_dim, c_dim)

    # (a) module-typical tiny batch -> plain-jnp fast path.
    x_small = jax.random.normal(k_small, (2, group_dim), dtype=jnp.float32)
    mu, sigma = mu_sigma_qc_forward(x_small, weight, bias, c_dim)
    mu, sigma = jax.block_until_ready((mu, sigma))
    r_mu, r_sigma = _reference(x_small, weight, bias, c_dim)
    assert jnp.allclose(mu, r_mu, atol=1e-5, rtol=1e-5)
    assert jnp.allclose(sigma, r_sigma, atol=1e-5, rtol=1e-5)

    # (b) gridless Pallas path (lane-packed); batch not a multiple of the pack
    #     factor, so the wrapper padding/un-padding is exercised.
    x_mid = jax.random.normal(k_mid, (1022, group_dim), dtype=jnp.float32)
    mu, sigma = mu_sigma_qc_forward(x_mid, weight, bias, c_dim)
    mu, sigma = jax.block_until_ready((mu, sigma))
    r_mu, r_sigma = _reference(x_mid, weight, bias, c_dim)
    assert jnp.allclose(mu, r_mu, atol=1e-5, rtol=1e-5)
    assert jnp.allclose(sigma, r_sigma, atol=1e-5, rtol=1e-5)

    # (c) tiled grid path (forced via a zero gridless budget + small block_batch
    #     to keep the demo small) with a ragged last block.
    x_big = jax.random.normal(k_big, (3600, group_dim), dtype=jnp.float32)
    mu, sigma = mu_sigma_qc_forward(
        x_big, weight, bias, c_dim, block_batch=1024, gridless_vmem_budget_bytes=0
    )
    mu, sigma = jax.block_until_ready((mu, sigma))
    r_mu, r_sigma = _reference(x_big, weight, bias, c_dim)
    assert jnp.allclose(mu, r_mu, atol=1e-5, rtol=1e-5)
    assert jnp.allclose(sigma, r_sigma, atol=1e-5, rtol=1e-5)

    print("KERNEL_OK")
</pallas_src>

<mosaic_0001>
module attributes {stable_mosaic.version = 11 : i64} {
  func.func @_mu_sigma_kernel(%arg0: memref<256x128xf32, #tpu.memory_space<vmem>>, %arg1: memref<128x128xf32, #tpu.memory_space<vmem>>, %arg2: memref<1x128xf32, #tpu.memory_space<vmem>>, %arg3: memref<256x128xf32, #tpu.memory_space<vmem>>) attributes {dimension_semantics = [], scalar_prefetch = 0 : i64, scratch_operands = 0 : i64, tpu.core_type = #tpu.core_type<tc>} {
    %c0 = arith.constant 0 : index
    %c0_0 = arith.constant 0 : index
    %0 = vector.load %arg0[%c0, %c0_0] : memref<256x128xf32, #tpu.memory_space<vmem>>, vector<256x128xf32>
    %c0_1 = arith.constant 0 : index
    %c0_2 = arith.constant 0 : index
    %1 = vector.load %arg1[%c0_1, %c0_2] : memref<128x128xf32, #tpu.memory_space<vmem>>, vector<128x128xf32>
    %cst = arith.constant dense<0.000000e+00> : vector<256x128xf32>
    %2 = tpu.matmul %0, %1, %cst {dimension_numbers = #tpu.dot_dimension_numbers<[1], [0], [0], [1], [0, 0, 1, 1], [], []>} : vector<256x128xf32>, vector<128x128xf32>, vector<256x128xf32> -> vector<256x128xf32>
    %c0_3 = arith.constant 0 : index
    %c0_4 = arith.constant 0 : index
    %3 = vector.load %arg2[%c0_3, %c0_4] : memref<1x128xf32, #tpu.memory_space<vmem>>, vector<1x128xf32>
    %4 = vector.broadcast %3 : vector<1x128xf32> to vector<256x128xf32>
    %5 = arith.addf %2, %4 : vector<256x128xf32>
    %6 = math.tanh %5 : vector<256x128xf32>
    %7 = tpu.iota {dimensions = array<i32: 1>} : vector<256x128xi32>
    %c32_i32 = arith.constant 32 : i32
    %c0_i32 = arith.constant 0 : i32
    %8 = arith.cmpi eq, %c32_i32, %c0_i32 : i32
    %c1_i32 = arith.constant 1 : i32
    %9 = arith.select %8, %c1_i32, %c32_i32 : i32
    %10 = vector.broadcast %9 : i32 to vector<256x128xi32>
    %11 = arith.remsi %7, %10 : vector<256x128xi32>
    %c0_i32_5 = arith.constant 0 : i32
    %12 = vector.broadcast %c0_i32_5 : i32 to vector<256x128xi32>
    %13 = arith.cmpi ne, %11, %12 : vector<256x128xi32>
    %c0_i32_6 = arith.constant 0 : i32
    %14 = vector.broadcast %c0_i32_6 : i32 to vector<256x128xi32>
    %15 = arith.cmpi slt, %11, %14 : vector<256x128xi32>
    %c0_i32_7 = arith.constant 0 : i32
    %16 = arith.cmpi slt, %9, %c0_i32_7 : i32
    %17 = vector.broadcast %16 : i1 to vector<256x128xi1>
    %18 = vector.broadcast %17 : vector<256x128xi1> to vector<256x128xi1>
    %19 = arith.xori %15, %18 : vector<256x128xi1>
    %20 = arith.andi %19, %13 : vector<256x128xi1>
    %21 = vector.broadcast %9 : i32 to vector<256x128xi32>
    %22 = arith.addi %11, %21 : vector<256x128xi32>
    %23 = arith.select %20, %22, %11 : vector<256x128xi1>, vector<256x128xi32>
    %c16_i32 = arith.constant 16 : i32
    %24 = vector.broadcast %c16_i32 : i32 to vector<256x128xi32>
    %25 = arith.cmpi sge, %23, %24 : vector<256x128xi32>
    %26 = math.exp %6 : vector<256x128xf32>
    %27 = arith.select %25, %26, %6 : vector<256x128xi1>, vector<256x128xf32>
    %c0_8 = arith.constant 0 : index
    %c0_9 = arith.constant 0 : index
    %28 = vector.load %arg3[%c0_8, %c0_9] : memref<256x128xf32, #tpu.memory_space<vmem>>, vector<256x128xf32>
    tpu.vector_store %arg3[%c0_8, %c0_9], %27 {strides = array<i32>} : memref<256x128xf32, #tpu.memory_space<vmem>>, vector<256x128xf32>,
    return
  }
}

</mosaic_0001>

<llo_original>
// kernel: tpu_custom_call.1
$region0: #{tpu_custom_call.1}
  #allocation0 [shape = 'u32[]', space=smem, size = 0x4, offset = 0x4, fixed_abs, tag = 'smem constant byte address 0x4 - core index']
  #allocation1 [shape = 'u32[72,128]{1,0:T(1,128)}', space=vmem, size = 0x9000, scoped, tag = 'internal scratch']
  %s0 = inlined_call_operand.hbm [shape: f32[256,128], index: 0, kind: input, shape index: {}]
  %s1 = inlined_call_operand.hbm [shape: f32[128,128], index: 1, kind: input, shape index: {}]
  %s2 = inlined_call_operand.vmem [shape: f32[1,128], index: 2, kind: input, shape index: {}]
  %s3 = inlined_call_operand.hbm [shape: f32[256,128], index: 3, kind: output, shape index: {}]
  %s4 = sld [smem:[#allocation0]]
  $region30: #{tpu_custom_call.1} parent=0
    _
  %s6 = ssub.s32 1, %s4
  %s7 = scalar_select 0, %s6, %s4
  $region1: #{tpu_custom_call.1} parent=0
    #allocation2 [shape = 'u8[131072]{0}', space=vmem, size = 0x20000, scoped, tag = 'input window, operand 0, single buffered']
    #allocation3 [shape = 's32[1]{0}', space=sflag, size = 0x4, scoped, tag = 'scoped memory for tpu_custom_call.1']
    #allocation4 [shape = 's32[1]{0}', space=sflag, size = 0x4, scoped, tag = 'scoped memory for tpu_custom_call.1']
    #allocation5 [shape = 'u8[65536]{0}', space=vmem, size = 0x10000, scoped, tag = 'input window, operand 1, single buffered']
    #allocation6 [shape = 's32[1]{0}', space=sflag, size = 0x4, scoped, tag = 'scoped memory for tpu_custom_call.1']
    #allocation7 [shape = 'u8[131072]{0}', space=vmem, size = 0x20000, scoped, tag = 'output window, operand 0, single buffered']
    %8 = vsyncpa [#allocation3], 0
    %9 = vsyncpa [#allocation6], 0
    %10 = vsyncpa [#allocation4], 0
    // Predicated region
    $region2: #{tpu_custom_call.1} parent=1 // pred_check
      _
    $region3: #{tpu_custom_call.1} parent=1 // pred_check_branch
      %12 = sbr.rel (0) target = $region5
    $region4: #{tpu_custom_call.1} parent=1 // pred_region
      %14 = vsyncadd [#allocation3], 0
      %s15 = sshll.u32 %s0, 4
      %s16 = int_to_ptr.hbm [resolvable:$true] %s15
      %s17 = sshll.u32 [#allocation2], 4
      %s18 = int_to_ptr.vmem [resolvable:$true] %s17
      %23 = dma.hbm_to_vmem [thread:$0]  %s16, 4096, %s18, [#allocation3], 128, 128, 8
    $region5: #{tpu_custom_call.1} parent=1 // pred_fallthru
      _
    // Predicated region
    $region6: #{tpu_custom_call.1} parent=1 // pred_check
      _
    $region7: #{tpu_custom_call.1} parent=1 // pred_check_branch
      %25 = sbr.rel (0) target = $region9
    $region8: #{tpu_custom_call.1} parent=1 // pred_region
      %27 = vsyncadd [#allocation6], 0
      %s28 = sshll.u32 %s1, 4
      %s29 = int_to_ptr.hbm [resolvable:$true] %s28
      %s30 = sshll.u32 [#allocation5], 4
      %s31 = int_to_ptr.vmem [resolvable:$true] %s30
      %36 = dma.hbm_to_vmem [thread:$0]  %s29, 2048, %s31, [#allocation6], 128, 128, 8
    $region9: #{tpu_custom_call.1} parent=1 // pred_fallthru
      _
    // Predicated region
    $region10: #{tpu_custom_call.1} parent=1 // pred_check
      _
    $region11: #{tpu_custom_call.1} parent=1 // pred_check_branch
      %38 = sbr.rel (0) target = $region13
    $region12: #{tpu_custom_call.1} parent=1 // pred_region
      _
    $region13: #{tpu_custom_call.1} parent=1 // pred_fallthru
      _
    // Predicated region
    $region14: #{tpu_custom_call.1} parent=1 // pred_check
      _
    $region15: #{tpu_custom_call.1} parent=1 // pred_check_branch
      %40 = sbr.rel (0) target = $region17
    $region16: #{tpu_custom_call.1} parent=1 // pred_region
      %42 = dma.done [#allocation3], 4096
    $region17: #{tpu_custom_call.1} parent=1 // pred_fallthru
      _
    // Predicated region
    $region18: #{tpu_custom_call.1} parent=1 // pred_check
      _
    $region19: #{tpu_custom_call.1} parent=1 // pred_check_branch
      %44 = sbr.rel (0) target = $region21
    $region20: #{tpu_custom_call.1} parent=1 // pred_region
      %46 = dma.done [#allocation6], 2048
    $region21: #{tpu_custom_call.1} parent=1 // pred_fallthru
      _
    %v47 = vld [vmem:[#allocation2] sm:$0xff]
    %v48 = vld [vmem:[#allocation2 + $0x8] sm:$0xff]
    %v49 = vld [vmem:[#allocation2 + $0x10] sm:$0xff]
    %v50 = vld [vmem:[#allocation2 + $0x18] sm:$0xff]
    %v51 = vld [vmem:[#allocation2 + $0x20] sm:$0xff]
    %v52 = vld [vmem:[#allocation2 + $0x28] sm:$0xff]
    %v53 = vld [vmem:[#allocation2 + $0x30] sm:$0xff]
    %v54 = vld [vmem:[#allocation2 + $0x38] sm:$0xff]
    %v55 = vld [vmem:[#allocation2 + $0x40] sm:$0xff]
    %v56 = vld [vmem:[#allocation2 + $0x48] sm:$0xff]
    %v57 = vld [vmem:[#allocation2 + $0x50] sm:$0xff]
    %v58 = vld [vmem:[#allocation2 + $0x58] sm:$0xff]
    %v59 = vld [vmem:[#allocation2 + $0x60] sm:$0xff]
    %v60 = vld [vmem:[#allocation2 + $0x68] sm:$0xff]
    %v61 = vld [vmem:[#allocation2 + $0x70] sm:$0xff]
    %v62 = vld [vmem:[#allocation2 + $0x78] sm:$0xff]
    %v63 = vld [vmem:[#allocation2 + $0x80] sm:$0xff]
    %v64 = vld [vmem:[#allocation2 + $0x88] sm:$0xff]
    %v65 = vld [vmem:[#allocation2 + $0x90] sm:$0xff]
    %v66 = vld [vmem:[#allocation2 + $0x98] sm:$0xff]
    %v67 = vld [vmem:[#allocation2 + $0xa0] sm:$0xff]
    %v68 = vld [vmem:[#allocation2 + $0xa8] sm:$0xff]
    %v69 = vld [vmem:[#allocation2 + $0xb0] sm:$0xff]
    %v70 = vld [vmem:[#allocation2 + $0xb8] sm:$0xff]
    %v71 = vld [vmem:[#allocation2 + $0xc0] sm:$0xff]
    %v72 = vld [vmem:[#allocation2 + $0xc8] sm:$0xff]
    %v73 = vld [vmem:[#allocation2 + $0xd0] sm:$0xff]
    %v74 = vld [vmem:[#allocation2 + $0xd8] sm:$0xff]
    %v75 = vld [vmem:[#allocation2 + $0xe0] sm:$0xff]
    %v76 = vld [vmem:[#allocation2 + $0xe8] sm:$0xff]
    %v77 = vld [vmem:[#allocation2 + $0xf0] sm:$0xff]
    %v78 = vld [vmem:[#allocation2 + $0xf8] sm:$0xff]
    %v79 = vld [vmem:[#allocation5] sm:$0xff]
    %v80 = vld [vmem:[#allocation5 + $0x8] sm:$0xff]
    %v81 = vld [vmem:[#allocation5 + $0x10] sm:$0xff]
    %v82 = vld [vmem:[#allocation5 + $0x18] sm:$0xff]
    %v83 = vld [vmem:[#allocation5 + $0x20] sm:$0xff]
    %v84 = vld [vmem:[#allocation5 + $0x28] sm:$0xff]
    %v85 = vld [vmem:[#allocation5 + $0x30] sm:$0xff]
    %v86 = vld [vmem:[#allocation5 + $0x38] sm:$0xff]
    %v87 = vld [vmem:[#allocation5 + $0x40] sm:$0xff]
    %v88 = vld [vmem:[#allocation5 + $0x48] sm:$0xff]
    %v89 = vld [vmem:[#allocation5 + $0x50] sm:$0xff]
    %v90 = vld [vmem:[#allocation5 + $0x58] sm:$0xff]
    %v91 = vld [vmem:[#allocation5 + $0x60] sm:$0xff]
    %v92 = vld [vmem:[#allocation5 + $0x68] sm:$0xff]
    %v93 = vld [vmem:[#allocation5 + $0x70] sm:$0xff]
    %v94 = vld [vmem:[#allocation5 + $0x78] sm:$0xff]
    %v95 = vld [vmem:[%s2] sm:$0x1]
    %v97 = vperm.slane %v95, 0
    %99 = vmatpush.msra.mxu0 %v94
    %100 = vmatpush.msra.mxu0 %v93
    %101 = vmatpush.msra.mxu0 %v92
    %102 = vmatpush.msra.mxu0 %v91
    %103 = vmatpush.msra.mxu0 %v90
    %104 = vmatpush.msra.mxu0 %v89
    %105 = vmatpush.msra.mxu0 %v88
    %106 = vmatpush.msra.mxu0 %v87
    %107 = vmatpush.msra.mxu0 %v86
    %108 = vmatpush.msra.mxu0 %v85
    %109 = vmatpush.msra.mxu0 %v84
    %110 = vmatpush.msra.mxu0 %v83
    %111 = vmatpush.msra.mxu0 %v82
    %112 = vmatpush.msra.mxu0 %v81
    %113 = vmatpush.msra.mxu0 %v80
    %114 = vmatpush.msra.mxu0 %v79
    %115 = vmatmul.f32.gmra.mxu0 %v47
    %v116 = vpop.f32.mrf.mxu0
    %v117 = vadd.f32 %v97, %v116
    %118 = vmatmul.f32.gmra.mxu0 %v48
    %v119 = vpop.f32.mrf.mxu0
    %v120 = vadd.f32 %v97, %v119
    %121 = vmatmul.f32.gmra.mxu0 %v49
    %v122 = vpop.f32.mrf.mxu0
    %v123 = vadd.f32 %v97, %v122
    %124 = vmatmul.f32.gmra.mxu0 %v50
    %v125 = vpop.f32.mrf.mxu0
    %v126 = vadd.f32 %v97, %v125
    %127 = vmatmul.f32.gmra.mxu0 %v51
    %v128 = vpop.f32.mrf.mxu0
    %v129 = vadd.f32 %v97, %v128
    %130 = vmatmul.f32.gmra.mxu0 %v52
    %v131 = vpop.f32.mrf.mxu0
    %v132 = vadd.f32 %v97, %v131
    %133 = vmatmul.f32.gmra.mxu0 %v53
    %v134 = vpop.f32.mrf.mxu0
    %v135 = vadd.f32 %v97, %v134
    %136 = vmatmul.f32.gmra.mxu0 %v54
    %v137 = vpop.f32.mrf.mxu0
    %v138 = vadd.f32 %v97, %v137
    %139 = vmatmul.f32.gmra.mxu0 %v55
    %v140 = vpop.f32.mrf.mxu0
    %v141 = vadd.f32 %v97, %v140
    %142 = vmatmul.f32.gmra.mxu0 %v56
    %v143 = vpop.f32.mrf.mxu0
    %v144 = vadd.f32 %v97, %v143
    %145 = vmatmul.f32.gmra.mxu0 %v57
    %v146 = vpop.f32.mrf.mxu0
    %v147 = vadd.f32 %v97, %v146
    %148 = vmatmul.f32.gmra.mxu0 %v58
    %v149 = vpop.f32.mrf.mxu0
    %v150 = vadd.f32 %v97, %v149
    %151 = vmatmul.f32.gmra.mxu0 %v59
    %v152 = vpop.f32.mrf.mxu0
    %v153 = vadd.f32 %v97, %v152
    %154 = vmatmul.f32.gmra.mxu0 %v60
    %v155 = vpop.f32.mrf.mxu0
    %v156 = vadd.f32 %v97, %v155
    %157 = vmatmul.f32.gmra.mxu0 %v61
    %v158 = vpop.f32.mrf.mxu0
    %v159 = vadd.f32 %v97, %v158
    %160 = vmatmul.f32.gmra.mxu0 %v62
    %v161 = vpop.f32.mrf.mxu0
    %v162 = vadd.f32 %v97, %v161
    %163 = vmatmul.f32.gmra.mxu0 %v63
    %v164 = vpop.f32.mrf.mxu0
    %v165 = vadd.f32 %v97, %v164
    %166 = vmatmul.f32.gmra.mxu0 %v64
    %v167 = vpop.f32.mrf.mxu0
    %v168 = vadd.f32 %v97, %v167
    %169 = vmatmul.f32.gmra.mxu0 %v65
    %v170 = vpop.f32.mrf.mxu0
    %v171 = vadd.f32 %v97, %v170
    %172 = vmatmul.f32.gmra.mxu0 %v66
    %v173 = vpop.f32.mrf.mxu0
    %v174 = vadd.f32 %v97, %v173
    %175 = vmatmul.f32.gmra.mxu0 %v67
    %v176 = vpop.f32.mrf.mxu0
    %v177 = vadd.f32 %v97, %v176
    %178 = vmatmul.f32.gmra.mxu0 %v68
    %v179 = vpop.f32.mrf.mxu0
    %v180 = vadd.f32 %v97, %v179
    %181 = vmatmul.f32.gmra.mxu0 %v69
    %v182 = vpop.f32.mrf.mxu0
    %v183 = vadd.f32 %v97, %v182
    %184 = vmatmul.f32.gmra.mxu0 %v70
    %v185 = vpop.f32.mrf.mxu0
    %v186 = vadd.f32 %v97, %v185
    %187 = vmatmul.f32.gmra.mxu0 %v71
    %v188 = vpop.f32.mrf.mxu0
    %v189 = vadd.f32 %v97, %v188
    %190 = vmatmul.f32.gmra.mxu0 %v72
    %v191 = vpop.f32.mrf.mxu0
    %v192 = vadd.f32 %v97, %v191
    %193 = vmatmul.f32.gmra.mxu0 %v73
    %v194 = vpop.f32.mrf.mxu0
    %v195 = vadd.f32 %v97, %v194
    %196 = vmatmul.f32.gmra.mxu0 %v74
    %v197 = vpop.f32.mrf.mxu0
    %v198 = vadd.f32 %v97, %v197
    %199 = vmatmul.f32.gmra.mxu0 %v75
    %v200 = vpop.f32.mrf.mxu0
    %v201 = vadd.f32 %v97, %v200
    %202 = vmatmul.f32.gmra.mxu0 %v76
    %v203 = vpop.f32.mrf.mxu0
    %v204 = vadd.f32 %v97, %v203
    %205 = vmatmul.f32.gmra.mxu0 %v77
    %v206 = vpop.f32.mrf.mxu0
    %v207 = vadd.f32 %v97, %v206
    %208 = vmatmul.f32.gmra.mxu0 %v78
    %v209 = vpop.f32.mrf.mxu0
    %v210 = vadd.f32 %v97, %v209
    %211 = vdwg.mxu0
    %v212 = vtanh.pop %v117
    %v213 = vtanh.pop %v120
    %v214 = vtanh.pop %v123
    %v215 = vtanh.pop %v126
    %v216 = vtanh.pop %v129
    %v217 = vtanh.pop %v132
    %v218 = vtanh.pop %v135
    %v219 = vtanh.pop %v138
    %v220 = vtanh.pop %v141
    %v221 = vtanh.pop %v144
    %v222 = vtanh.pop %v147
    %v223 = vtanh.pop %v150
    %v224 = vtanh.pop %v153
    %v225 = vtanh.pop %v156
    %v226 = vtanh.pop %v159
    %v227 = vtanh.pop %v162
    %v228 = vtanh.pop %v165
    %v229 = vtanh.pop %v168
    %v230 = vtanh.pop %v171
    %v231 = vtanh.pop %v174
    %v232 = vtanh.pop %v177
    %v233 = vtanh.pop %v180
    %v234 = vtanh.pop %v183
    %v235 = vtanh.pop %v186
    %v236 = vtanh.pop %v189
    %v237 = vtanh.pop %v192
    %v238 = vtanh.pop %v195
    %v239 = vtanh.pop %v198
    %v240 = vtanh.pop %v201
    %v241 = vtanh.pop %v204
    %v242 = vtanh.pop %v207
    %v243 = vtanh.pop %v210
    %v244 = vlaneseq
    %v245 = vand.u32 %v244, 127
    %vm246 = vcmp.lt.s32.totalorder %v245, 0
    %v247 = vsub.s32 0, %v245
    %v248 = vsel %vm246, %v247, %v245
    %v249 = vshrl.u32 %v248, 5
    %v250 = vand.u32 %v248, 31
    %v251 = vsub.s32 0, %v250
    %v252 = vsel %vm246, %v251, %v250
    %vm253 = vcmp.ne.s32.totalorder %v252, 0
    %vm254 = vcmp.lt.s32.totalorder %v252, 0
    %vm255 = vmand %vm254, %vm253
    %v256 = vadd.s32 %v252, 32
    %v257 = vsel %vm255, %v256, %v252
    %vm258 = vcmp.ge.s32.totalorder %v257, 16
    %v259 = vmul.f32 %v212, 1.442695
    %v260 = vpow.pop %v259
    %v261 = vmul.f32 %v213, 1.442695
    %v262 = vpow.pop %v261
    %v263 = vmul.f32 %v214, 1.442695
    %v264 = vpow.pop %v263
    %v265 = vmul.f32 %v215, 1.442695
    %v266 = vpow.pop %v265
    %v267 = vmul.f32 %v216, 1.442695
    %v268 = vpow.pop %v267
    %v269 = vmul.f32 %v217, 1.442695
    %v270 = vpow.pop %v269
    %v271 = vmul.f32 %v218, 1.442695
    %v272 = vpow.pop %v271
    %v273 = vmul.f32 %v219, 1.442695
    %v274 = vpow.pop %v273
    %v275 = vmul.f32 %v220, 1.442695
    %v276 = vpow.pop %v275
    %v277 = vmul.f32 %v221, 1.442695
    %v278 = vpow.pop %v277
    %v279 = vmul.f32 %v222, 1.442695
    %v280 = vpow.pop %v279
    %v281 = vmul.f32 %v223, 1.442695
    %v282 = vpow.pop %v281
    %v283 = vmul.f32 %v224, 1.442695
    %v284 = vpow.pop %v283
    %v285 = vmul.f32 %v225, 1.442695
    %v286 = vpow.pop %v285
    %v287 = vmul.f32 %v226, 1.442695
    %v288 = vpow.pop %v287
    %v289 = vmul.f32 %v227, 1.442695
    %v290 = vpow.pop %v289
    %v291 = vmul.f32 %v228, 1.442695
    %v292 = vpow.pop %v291
    %v293 = vmul.f32 %v229, 1.442695
    %v294 = vpow.pop %v293
    %v295 = vmul.f32 %v230, 1.442695
    %v296 = vpow.pop %v295
    %v297 = vmul.f32 %v231, 1.442695
    %v298 = vpow.pop %v297
    %v299 = vmul.f32 %v232, 1.442695
    %v300 = vpow.pop %v299
    %v301 = vmul.f32 %v233, 1.442695
    %v302 = vpow.pop %v301
    %v303 = vmul.f32 %v234, 1.442695
    %v304 = vpow.pop %v303
    %v305 = vmul.f32 %v235, 1.442695
    %v306 = vpow.pop %v305
    %v307 = vmul.f32 %v236, 1.442695
    %v308 = vpow.pop %v307
    %v309 = vmul.f32 %v237, 1.442695
    %v310 = vpow.pop %v309
    %v311 = vmul.f32 %v238, 1.442695
    %v312 = vpow.pop %v311
    %v313 = vmul.f32 %v239, 1.442695
    %v314 = vpow.pop %v313
    %v315 = vmul.f32 %v240, 1.442695
    %v316 = vpow.pop %v315
    %v317 = vmul.f32 %v241, 1.442695
    %v318 = vpow.pop %v317
    %v319 = vmul.f32 %v242, 1.442695
    %v320 = vpow.pop %v319
    %v321 = vmul.f32 %v243, 1.442695
    %v322 = vpow.pop %v321
    %v323 = vsel %vm258, %v260, %v212
    %v324 = vsel %vm258, %v262, %v213
    %v325 = vsel %vm258, %v264, %v214
    %v326 = vsel %vm258, %v266, %v215
    %v327 = vsel %vm258, %v268, %v216
    %v328 = vsel %vm258, %v270, %v217
    %v329 = vsel %vm258, %v272, %v218
    %v330 = vsel %vm258, %v274, %v219
    %v331 = vsel %vm258, %v276, %v220
    %v332 = vsel %vm258, %v278, %v221
    %v333 = vsel %vm258, %v280, %v222
    %v334 = vsel %vm258, %v282, %v223
    %v335 = vsel %vm258, %v284, %v224
    %v336 = vsel %vm258, %v286, %v225
    %v337 = vsel %vm258, %v288, %v226
    %v338 = vsel %vm258, %v290, %v227
    %v339 = vsel %vm258, %v292, %v228
    %v340 = vsel %vm258, %v294, %v229
    %v341 = vsel %vm258, %v296, %v230
    %v342 = vsel %vm258, %v298, %v231
    %v343 = vsel %vm258, %v300, %v232
    %v344 = vsel %vm258, %v302, %v233
    %v345 = vsel %vm258, %v304, %v234
    %v346 = vsel %vm258, %v306, %v235
    %v347 = vsel %vm258, %v308, %v236
    %v348 = vsel %vm258, %v310, %v237
    %v349 = vsel %vm258, %v312, %v238
    %v350 = vsel %vm258, %v314, %v239
    %v351 = vsel %vm258, %v316, %v240
    %v352 = vsel %vm258, %v318, %v241
    %v353 = vsel %vm258, %v320, %v242
    %v354 = vsel %vm258, %v322, %v243
    %355 = vst [vmem:[#allocation7] sm:$0xff] %v323
    %356 = vst [vmem:[#allocation7 + $0x8] sm:$0xff] %v324
    %357 = vst [vmem:[#allocation7 + $0x10] sm:$0xff] %v325
    %358 = vst [vmem:[#allocation7 + $0x18] sm:$0xff] %v326
    %359 = vst [vmem:[#allocation7 + $0x20] sm:$0xff] %v327
    %360 = vst [vmem:[#allocation7 + $0x28] sm:$0xff] %v328
    %361 = vst [vmem:[#allocation7 + $0x30] sm:$0xff] %v329
    %362 = vst [vmem:[#allocation7 + $0x38] sm:$0xff] %v330
    %363 = vst [vmem:[#allocation7 + $0x40] sm:$0xff] %v331
    %364 = vst [vmem:[#allocation7 + $0x48] sm:$0xff] %v332
    %365 = vst [vmem:[#allocation7 + $0x50] sm:$0xff] %v333
    %366 = vst [vmem:[#allocation7 + $0x58] sm:$0xff] %v334
    %367 = vst [vmem:[#allocation7 + $0x60] sm:$0xff] %v335
    %368 = vst [vmem:[#allocation7 + $0x68] sm:$0xff] %v336
    %369 = vst [vmem:[#allocation7 + $0x70] sm:$0xff] %v337
    %370 = vst [vmem:[#allocation7 + $0x78] sm:$0xff] %v338
    %371 = vst [vmem:[#allocation7 + $0x80] sm:$0xff] %v339
    %372 = vst [vmem:[#allocation7 + $0x88] sm:$0xff] %v340
    %373 = vst [vmem:[#allocation7 + $0x90] sm:$0xff] %v341
    %374 = vst [vmem:[#allocation7 + $0x98] sm:$0xff] %v342
    %375 = vst [vmem:[#allocation7 + $0xa0] sm:$0xff] %v343
    %376 = vst [vmem:[#allocation7 + $0xa8] sm:$0xff] %v344
    %377 = vst [vmem:[#allocation7 + $0xb0] sm:$0xff] %v345
    %378 = vst [vmem:[#allocation7 + $0xb8] sm:$0xff] %v346
    %379 = vst [vmem:[#allocation7 + $0xc0] sm:$0xff] %v347
    %380 = vst [vmem:[#allocation7 + $0xc8] sm:$0xff] %v348
    %381 = vst [vmem:[#allocation7 + $0xd0] sm:$0xff] %v349
    %382 = vst [vmem:[#allocation7 + $0xd8] sm:$0xff] %v350
    %383 = vst [vmem:[#allocation7 + $0xe0] sm:$0xff] %v351
    %384 = vst [vmem:[#allocation7 + $0xe8] sm:$0xff] %v352
    %385 = vst [vmem:[#allocation7 + $0xf0] sm:$0xff] %v353
    %386 = vst [vmem:[#allocation7 + $0xf8] sm:$0xff] %v354
    // Predicated region
    $region22: #{tpu_custom_call.1} parent=1 // pred_check
      _
    $region23: #{tpu_custom_call.1} parent=1 // pred_check_branch
      %388 = sbr.rel (0) target = $region25
    $region24: #{tpu_custom_call.1} parent=1 // pred_region
      %390 = vsyncadd [#allocation4], 0
      %s391 = sshll.u32 [#allocation7], 4
      %s392 = int_to_ptr.vmem [resolvable:$true] %s391
      %s393 = sshll.u32 %s3, 4
      %s394 = int_to_ptr.hbm [resolvable:$true] %s393
      %399 = dma.vmem_to_hbm [thread:$0]  %s392, 4096, %s394, [#allocation4], 128, 128, 8
    $region25: #{tpu_custom_call.1} parent=1 // pred_fallthru
      _
    // Predicated region
    $region26: #{tpu_custom_call.1} parent=1 // pred_check
      _
    $region27: #{tpu_custom_call.1} parent=1 // pred_check_branch
      %401 = sbr.rel (0) target = $region29
    $region28: #{tpu_custom_call.1} parent=1 // pred_region
      %403 = dma.done [#allocation4], 4096
    $region29: #{tpu_custom_call.1} parent=1 // pred_fallthru
      _
    %404 = vsyncpa [#allocation3], 1
    %405 = vsyncpa [#allocation6], 1
    %406 = vsyncpa [#allocation4], 1

</llo_original>
